<compile_context>
chip_gen: v7x
topology: tpu7x:2x2x1
jax: 0.10.0
libtpu: 0.0.40
codegen_flags: <defaults>
</compile_context>

<pallas_src>
import functools
import math

import jax
import jax.numpy as jnp
from jax.experimental import pallas as pl
from jax.experimental.pallas import tpu as pltpu

_LANE = 128
_ROW_ALIGN = 16  # row blocks rounded to 16 so bf16 spike tiles (16,128) stay unmasked


def _round_up(n, m):
    return ((n + m - 1) // m) * m


def _tpu_tile_config():
    """(max_block_rows, min_grid_steps) for the current TPU generation.

    max_block_rows: f32 rows per tile. 2048 rows = 1 MiB/tile; worst case
    (2 inputs + 2 outputs, double buffered) = 8 MiB -> fits v5e's 16 MiB scoped-VMEM
    default.  4096 rows = 2 MiB/tile (16 MiB footprint) fits the 32 MiB default on
    v6e / v7x and halves the ~0.35 us per-grid-step overhead.
    min_grid_steps: v7x has 2 TensorCores sharing the "parallel" grid axis, so keep
    at least 2 grid steps there; v5e/v6e are single-TC.
    """
    kind = ""
    try:
        kind = jax.devices()[0].device_kind.lower()
    except Exception:
        pass
    if any(v in kind for v in ("v2", "v3", "v4", "v5")):
        return 2048, 1
    if "v6" in kind:
        return 4096, 1
    return 4096, 2  # v7x and newer


def _spike_update(v, spikes_ref, vmem_out_ref, threshold, reset):
    fired = v >= threshold
    # Spikes are exactly {0,1}: emitting them narrow (bf16) is lossless and halves
    # that HBM stream (and what the downstream layer has to read).
    spikes_ref[...] = jnp.where(fired, 1.0, 0.0).astype(spikes_ref.dtype)
    if reset == "to-zero":
        vmem_out_ref[...] = jnp.where(fired, 0.0, v).astype(vmem_out_ref.dtype)
    elif reset == "to-threshold":
        vmem_out_ref[...] = jnp.where(fired, v - threshold, v).astype(vmem_out_ref.dtype)
    else:
        # Invalid reset mechanism: PyTorch only prints; membrane passes through unchanged.
        vmem_out_ref[...] = v.astype(vmem_out_ref.dtype)


def _spike_kernel_acc(x_ref, vmem_ref, spikes_ref, vmem_out_ref, *, threshold, reset):
    _spike_update(vmem_ref[...] + x_ref[...], spikes_ref, vmem_out_ref, threshold, reset)


def _spike_kernel_noacc(vmem_ref, spikes_ref, vmem_out_ref, *, threshold, reset):
    _spike_update(vmem_ref[...], spikes_ref, vmem_out_ref, threshold, reset)


def _pallas_spike_call(kernel, inputs, rows, block_rows, vmem_input_index,
                       spike_dtype, allow_input_fusion=None):
    spec = pl.BlockSpec((block_rows, _LANE), lambda i: (i, 0))
    return pl.pallas_call(
        kernel,
        out_shape=(
            jax.ShapeDtypeStruct((rows, _LANE), spike_dtype),   # spikes
            jax.ShapeDtypeStruct((rows, _LANE), jnp.float32),   # updated membrane
        ),
        # cdiv grid: the (possibly ragged) last block is masked by Pallas, so the
        # membrane slab only ever carries the <128-element lane pad, never block pad.
        grid=(pl.cdiv(rows, block_rows),),
        in_specs=[spec] * len(inputs),
        out_specs=[spec, spec],
        # Membrane state is updated in place (no second full-size HBM buffer).
        input_output_aliases={vmem_input_index: 1},
        compiler_params=pltpu.CompilerParams(
            dimension_semantics=("parallel",),
            allow_input_fusion=allow_input_fusion,
        ),
    )(*inputs)


@functools.partial(
    jax.jit,
    static_argnames=("threshold", "reset", "block_rows", "spike_dtype"),
    donate_argnames=("vmem2d",),
)
def _step_accumulate(x, vmem2d, *, threshold, reset, block_rows, spike_dtype):
    rows = vmem2d.shape[0]
    total = x.size
    pad = rows * _LANE - total
    if pad == 0:
        # Fast path (numel % 128 == 0, the common CNN case): reshape is a free bitcast,
        # no pad / slice copies on either side of the kernel.
        x2d = x.reshape(rows, _LANE)
        fusion = None
    else:
        # Ragged tail (<128 elements): pad the flattened input to the lane width and
        # allow XLA to fuse that pad into the pallas input DMA instead of
        # materializing an extra full copy of x in HBM.
        x2d = jnp.pad(x.reshape(-1), (0, pad)).reshape(rows, _LANE)
        fusion = [True, False]  # x2d producer may fuse; membrane is the aliased state
    kernel = functools.partial(_spike_kernel_acc, threshold=threshold, reset=reset)
    spikes2d, vmem2d = _pallas_spike_call(
        kernel, (x2d, vmem2d), rows, block_rows, 1, spike_dtype, fusion)
    if pad == 0:
        spikes = spikes2d.reshape(x.shape)          # free bitcast
    else:
        # Padded tail lanes may "fire" if threshold <= 0; they are sliced away here,
        # so visible spikes / membrane stay correct.
        spikes = spikes2d.reshape(-1)[:total].reshape(x.shape)
    return spikes, vmem2d


@functools.partial(
    jax.jit,
    static_argnames=("threshold", "reset", "block_rows", "spike_dtype", "out_shape"),
    donate_argnames=("vmem2d",),
)
def _step_no_accumulate(vmem2d, *, threshold, reset, block_rows, spike_dtype, out_shape):
    # Clamp step: x is never read -> one fewer HBM stream than the accumulate variant.
    rows = vmem2d.shape[0]
    total = math.prod(out_shape)
    kernel = functools.partial(_spike_kernel_noacc, threshold=threshold, reset=reset)
    spikes2d, vmem2d = _pallas_spike_call(
        kernel, (vmem2d,), rows, block_rows, 0, spike_dtype, None)
    if rows * _LANE == total:
        spikes = spikes2d.reshape(out_shape)
    else:
        spikes = spikes2d.reshape(-1)[:total].reshape(out_shape)
    return spikes, vmem2d


class SpikeRelu:
    """JAX/Pallas port of the stateful PyTorch spikeRelu module.

    The membrane is held on device as a lane-dense (rows, 128) f32 slab
    (rows = cdiv(numel, 128)) and updated in place.  Spikes default to bfloat16
    (exact for {0,1}); pass spike_dtype=jnp.float32 to match torch's dtype exactly.
    """

    def __init__(self, v_th, layer_num=0, clp_slp=0, reset="to-threshold",
                 spike_dtype=jnp.bfloat16, max_block_rows=None, min_grid_steps=None):
        self.threshold = float(v_th)
        self.layer_num = layer_num
        self.d = clp_slp
        self.clamp_time = layer_num * clp_slp
        self.reset = reset
        self.spike_dtype = spike_dtype
        self._max_block_rows = max_block_rows
        self._min_grid_steps = min_grid_steps
        self.vmem2d = None            # (rows, 128) f32 membrane slab, kept on device
        self._vmem_is_zero = True     # True until the membrane can differ from 0
        self._zero_spikes = None
        self._shape = None
        self._total = None
        self._rows = None
        self._block_rows = None

    def _init_layout(self, x):
        self._shape = tuple(x.shape)
        self._total = int(x.size)
        rows = pl.cdiv(self._total, _LANE)
        self._rows = rows
        max_rows, min_steps = _tpu_tile_config()
        if self._max_block_rows is not None:
            max_rows = self._max_block_rows
        if self._min_grid_steps is not None:
            min_steps = self._min_grid_steps
        # Biggest tile that (a) fits the per-generation scoped-VMEM budget and (b)
        # leaves at least `min_steps` grid steps so v7x shards the "parallel" axis
        # over both TensorCores.  No rounding of rows to the block size: the cdiv
        # grid masks the ragged last block.
        self._block_rows = max(
            _ROW_ALIGN,
            min(max_rows, _round_up(pl.cdiv(rows, min_steps), _ROW_ALIGN)),
        )

    def membrane(self):
        """Membrane potential in the input's shape (for inspection / testing)."""
        if self.vmem2d is None:
            return jnp.zeros(self._shape, jnp.float32)
        return self.vmem2d.reshape(-1)[: self._total].reshape(self._shape)

    def __call__(self, x):
        x = jnp.asarray(x)
        self.clamp_time -= 1
        accumulate = self.clamp_time <= 0   # static Python flag -> picks kernel variant

        if self._shape is None:
            self._init_layout(x)
        elif tuple(x.shape) != self._shape:
            raise ValueError(
                f"SpikeRelu: input shape changed from {self._shape} to {tuple(x.shape)}")

        if not accumulate and self._vmem_is_zero and self.threshold > 0.0:
            # Clamp warm-up with a pristine zero membrane and positive threshold:
            # nothing can fire and the membrane stays zero -> skip the kernel (and
            # the membrane allocation) entirely.  These steps are essentially free.
            if self._zero_spikes is None:
                self._zero_spikes = jnp.zeros(self._shape, self.spike_dtype)
            return self._zero_spikes

        if self.vmem2d is None:
            # TODO(synk): PyTorch keeps vmem as a python scalar 0 until first use; here
            # the membrane is materialized as a zero slab in the lane-dense layout.
            self.vmem2d = jnp.zeros((self._rows, _LANE), jnp.float32)

        if accumulate:
            spikes, self.vmem2d = _step_accumulate(
                x, self.vmem2d,
                threshold=self.threshold, reset=self.reset,
                block_rows=self._block_rows, spike_dtype=self.spike_dtype)
        else:
            spikes, self.vmem2d = _step_no_accumulate(
                self.vmem2d,
                threshold=self.threshold, reset=self.reset,
                block_rows=self._block_rows, spike_dtype=self.spike_dtype,
                out_shape=self._shape)
        self._vmem_is_zero = False
        return spikes


def _ref_step(x, vmem, accumulate, threshold, reset):
    v = (vmem + x) if accumulate else vmem
    spikes = jnp.where(v >= threshold, 1.0, 0.0)
    if reset == "to-zero":
        v_new = jnp.where(v >= threshold, 0.0, v)
    elif reset == "to-threshold":
        v_new = jnp.where(v >= threshold, v - threshold, v)
    else:
        v_new = v
    return spikes, v_new


if __name__ == "__main__":
    key = jax.random.PRNGKey(0)
    B, C, H, W = 2, 4, 16, 16
    v_th = 0.5

    # Neuron 1: always accumulating, reset to-threshold (lane-aligned fast path).
    n1 = SpikeRelu(v_th, layer_num=0, clp_slp=0, reset="to-threshold")
    vref1 = jnp.zeros((B, C, H, W), jnp.float32)

    # Neuron 2: one clamp step (kernel skipped entirely), then accumulate, reset to-zero.
    n2 = SpikeRelu(v_th, layer_num=1, clp_slp=2, reset="to-zero")
    vref2 = jnp.zeros((B, C, H, W), jnp.float32)

    # Neuron 3: ragged shape (numel % 128 != 0) -> pad/fusion path + ragged cdiv grid.
    rg_shape = (3, 5, 17, 17)
    n3 = SpikeRelu(v_th, layer_num=0, clp_slp=0, reset="to-threshold")
    vref3 = jnp.zeros(rg_shape, jnp.float32)

    # Neuron 4: negative threshold -> clamp step cannot be skipped, exercises the
    # no-accumulate kernel variant before switching to accumulate.
    n4 = SpikeRelu(-0.25, layer_num=1, clp_slp=2, reset="to-threshold")
    vref4 = jnp.zeros((B, C, H, W), jnp.float32)

    ok = True
    for t in range(4):
        key, k1, k2, k3, k4 = jax.random.split(key, 5)
        x1 = jax.random.normal(k1, (B, C, H, W), jnp.float32)
        x2 = jax.random.normal(k2, (B, C, H, W), jnp.float32)
        x3 = jax.random.normal(k3, rg_shape, jnp.float32)
        x4 = jax.random.normal(k4, (B, C, H, W), jnp.float32)

        s1 = jax.block_until_ready(n1(x1))
        s2 = jax.block_until_ready(n2(x2))
        s3 = jax.block_until_ready(n3(x3))
        s4 = jax.block_until_ready(n4(x4))

        s1_ref, vref1 = _ref_step(x1, vref1, True, v_th, "to-threshold")
        acc24 = (2 - (t + 1)) <= 0  # clamp_time after this step's decrement
        s2_ref, vref2 = _ref_step(x2, vref2, acc24, v_th, "to-zero")
        s3_ref, vref3 = _ref_step(x3, vref3, True, v_th, "to-threshold")
        s4_ref, vref4 = _ref_step(x4, vref4, acc24, -0.25, "to-threshold")

        ok = ok and bool(jnp.array_equal(s1.astype(jnp.float32), s1_ref))
        ok = ok and bool(jnp.array_equal(s2.astype(jnp.float32), s2_ref))
        ok = ok and bool(jnp.array_equal(s3.astype(jnp.float32), s3_ref))
        ok = ok and bool(jnp.array_equal(s4.astype(jnp.float32), s4_ref))
        ok = ok and bool(jnp.allclose(n1.membrane(), vref1))
        ok = ok and bool(jnp.allclose(n2.membrane(), vref2))
        ok = ok and bool(jnp.allclose(n3.membrane(), vref3))
        ok = ok and bool(jnp.allclose(n4.membrane(), vref4))

    print("KERNEL_OK" if ok else "KERNEL_MISMATCH")
</pallas_src>

<mosaic_0001>
module attributes {stable_mosaic.version = 11 : i64} {
  func.func @_spike_kernel_acc(%arg0: i32, %arg1: memref<16x128xf32, #tpu.memory_space<vmem>>, %arg2: memref<16x128xf32, #tpu.memory_space<vmem>>, %arg3: memref<16x128xbf16, #tpu.memory_space<vmem>>, %arg4: memref<16x128xf32, #tpu.memory_space<vmem>>) attributes {dimension_semantics = [#tpu.dimension_semantics<parallel>], iteration_bounds = array<i64: 1>, scalar_prefetch = 0 : i64, scratch_operands = 0 : i64, tpu.core_type = #tpu.core_type<tc>, window_params = [{transform_indices = @transform_0, window_bounds = array<i64: 16, 128>}, {transform_indices = @transform_1, window_bounds = array<i64: 16, 128>}, {transform_indices = @transform_2, window_bounds = array<i64: 16, 128>}, {transform_indices = @transform_3, window_bounds = array<i64: 16, 128>}]} {
    %c0 = arith.constant 0 : index
    %c0_0 = arith.constant 0 : index
    %0 = vector.load %arg2[%c0, %c0_0] : memref<16x128xf32, #tpu.memory_space<vmem>>, vector<16x128xf32>
    %c0_1 = arith.constant 0 : index
    %c0_2 = arith.constant 0 : index
    %1 = vector.load %arg1[%c0_1, %c0_2] : memref<16x128xf32, #tpu.memory_space<vmem>>, vector<16x128xf32>
    %2 = arith.addf %0, %1 : vector<16x128xf32>
    %cst = arith.constant 5.000000e-01 : f32
    %3 = vector.broadcast %cst : f32 to vector<16x128xf32>
    %4 = arith.cmpf oge, %2, %3 : vector<16x128xf32>
    %cst_3 = arith.constant 1.000000e+00 : f32
    %cst_4 = arith.constant 0.000000e+00 : f32
    %5 = vector.broadcast %cst_3 : f32 to vector<16x128xf32>
    %6 = vector.broadcast %cst_4 : f32 to vector<16x128xf32>
    %7 = arith.select %4, %5, %6 : vector<16x128xi1>, vector<16x128xf32>
    %8 = arith.truncf %7 : vector<16x128xf32> to vector<16x128xbf16>
    %c0_5 = arith.constant 0 : index
    %c0_6 = arith.constant 0 : index
    %9 = vector.load %arg3[%c0_5, %c0_6] : memref<16x128xbf16, #tpu.memory_space<vmem>>, vector<16x128xbf16>
    tpu.vector_store %arg3[%c0_5, %c0_6], %8 {strides = array<i32>} : memref<16x128xbf16, #tpu.memory_space<vmem>>, vector<16x128xbf16>,
    %cst_7 = arith.constant 5.000000e-01 : f32
    %10 = vector.broadcast %cst_7 : f32 to vector<16x128xf32>
    %11 = arith.subf %2, %10 : vector<16x128xf32>
    %12 = arith.select %4, %11, %2 : vector<16x128xi1>, vector<16x128xf32>
    %c0_8 = arith.constant 0 : index
    %c0_9 = arith.constant 0 : index
    %13 = vector.load %arg4[%c0_8, %c0_9] : memref<16x128xf32, #tpu.memory_space<vmem>>, vector<16x128xf32>
    tpu.vector_store %arg4[%c0_8, %c0_9], %12 {strides = array<i32>} : memref<16x128xf32, #tpu.memory_space<vmem>>, vector<16x128xf32>,
    return
  }
  func.func @transform_0(%arg0: i32) -> (i32, i32) {
    %c0_i32 = arith.constant 0 : i32
    %c0_i32_0 = arith.constant 0 : i32
    return %arg0, %c0_i32 : i32, i32
  }
  func.func @transform_1(%arg0: i32) -> (i32, i32) {
    %c0_i32 = arith.constant 0 : i32
    %c0_i32_0 = arith.constant 0 : i32
    return %arg0, %c0_i32 : i32, i32
  }
  func.func @transform_2(%arg0: i32) -> (i32, i32) {
    %c0_i32 = arith.constant 0 : i32
    %c0_i32_0 = arith.constant 0 : i32
    return %arg0, %c0_i32 : i32, i32
  }
  func.func @transform_3(%arg0: i32) -> (i32, i32) {
    %c0_i32 = arith.constant 0 : i32
    %c0_i32_0 = arith.constant 0 : i32
    return %arg0, %c0_i32 : i32, i32
  }
}

</mosaic_0001>

<llo_original>
// kernel: _step_accumulate.1
$region0: #{_step_accumulate.1}
  #allocation0 [shape = 'u32[]', space=smem, size = 0x4, offset = 0x4, fixed_abs, tag = 'smem constant byte address 0x4 - core index']
  #allocation1 [shape = 'u32[144,128]{1,0:T(1,128)}', space=vmem, size = 0x12000, scoped, tag = 'internal scratch']
  %s0 = inlined_call_operand.vmem [shape: f32[16,128], index: 0, kind: input, shape index: {}]
  %s1 = inlined_call_operand.vmem [shape: f32[16,128], index: 1, kind: input, shape index: {}, may-alias: {1,3}]
  %s2 = inlined_call_operand.vmem [shape: bf16[16,128], index: 2, kind: output, shape index: {0}]
  %s3 = inlined_call_operand.vmem [shape: f32[16,128], index: 3, kind: output, shape index: {1}, may-alias: {1,3}]
  %4 = xla_tuple %s2, %s3
  %s5 = sld [smem:[#allocation0]]
  $region26: #{_step_accumulate.1} parent=0
    _
  %s7 = ssub.s32 1, %s5
  %s8 = scalar_select 0, %s7, %s5
  // Predicated region
  $region2: #{_step_accumulate.1} parent=0 // pred_check
    _
  $region3: #{_step_accumulate.1} parent=0 // pred_check_branch
    %10 = sbr.rel (0) target = $region5
  $region4: #{_step_accumulate.1} parent=0 // pred_region
    _
  $region5: #{_step_accumulate.1} parent=0 // pred_fallthru
    _
  // Predicated region
  $region6: #{_step_accumulate.1} parent=0 // pred_check
    _
  $region7: #{_step_accumulate.1} parent=0 // pred_check_branch
    %12 = sbr.rel (0) target = $region9
  $region8: #{_step_accumulate.1} parent=0 // pred_region
    _
  $region9: #{_step_accumulate.1} parent=0 // pred_fallthru
    _
  %v13 = vld [vmem:[%s1] sm:$0xff]
  %v14 = vld [vmem:[%s1 + $0x8] sm:$0xff]
  %v15 = vld [vmem:[%s0] sm:$0xff]
  %v16 = vld [vmem:[%s0 + $0x8] sm:$0xff]
  %v17 = vadd.f32 %v13, %v15
  %v18 = vadd.f32 %v14, %v16
  %vm19 = vcmp.ge.f32.partialorder %v17, 0.5
  %vm20 = vcmp.ge.f32.partialorder %v18, 0.5
  %v21 = vsel %vm19, 1.0, 0.0
  %v22 = vsel %vm20, 1.0, 0.0
  %v23 = vpack.c.bf16 %v22, %v21
  %v25 = vunpack.c.l.b16 %v23
  %v26 = vunpack.c.h.b16 %v23
  %v27 = vpack.c.b16 %v25, %v25
  %v28 = vpack.c.b16 %v26, %v26
  %31 = vst [vmem:[%s2] sm:$0xf] %v27
  %32 = vst [vmem:[%s2 + $0x4] sm:$0xf] %v28
  %v33 = vsub.f32 %v17, 0.5
  %v34 = vsub.f32 %v18, 0.5
  %v35 = vsel %vm19, %v33, %v17
  %v36 = vsel %vm20, %v34, %v18
  %37 = vst [vmem:[%s3] sm:$0xff] %v35
  %38 = vst [vmem:[%s3 + $0x8] sm:$0xff] %v36
  // Predicated region
  $region10: #{_step_accumulate.1} parent=0 // pred_check
    _
  $region11: #{_step_accumulate.1} parent=0 // pred_check_branch
    %40 = sbr.rel (0) target = $region13
  $region12: #{_step_accumulate.1} parent=0 // pred_region
    _
  $region13: #{_step_accumulate.1} parent=0 // pred_fallthru
    _
  // Predicated region
  $region14: #{_step_accumulate.1} parent=0 // pred_check
    _
  $region15: #{_step_accumulate.1} parent=0 // pred_check_branch
    %42 = sbr.rel (0) target = $region17
  $region16: #{_step_accumulate.1} parent=0 // pred_region
    _
  $region17: #{_step_accumulate.1} parent=0 // pred_fallthru
    _
  // Predicated region
  $region18: #{_step_accumulate.1} parent=0 // pred_check
    _
  $region19: #{_step_accumulate.1} parent=0 // pred_check_branch
    %44 = sbr.rel (0) target = $region21
  $region20: #{_step_accumulate.1} parent=0 // pred_region
    _
  $region21: #{_step_accumulate.1} parent=0 // pred_fallthru
    _
  // Predicated region
  $region22: #{_step_accumulate.1} parent=0 // pred_check
    _
  $region23: #{_step_accumulate.1} parent=0 // pred_check_branch
    %46 = sbr.rel (0) target = $region25
  $region24: #{_step_accumulate.1} parent=0 // pred_region
    _
  $region25: #{_step_accumulate.1} parent=0 // pred_fallthru
    _

</llo_original>
